<compile_context>
chip_gen: v7x
topology: tpu7x:2x2x1
jax: 0.10.0
libtpu: 0.0.40
codegen_flags: <defaults>
</compile_context>

<pallas_src>
import functools

import jax
import jax.numpy as jnp
from jax.experimental import pallas as pl
from jax.experimental.pallas import tpu as pltpu

_SQRT1_2 = 0.7071067811865476


# -----------------------------------------------------------------------------
# Exact GELU via a 1.5e-7-accurate erf (Abramowitz & Stegun 7.1.26).
# Used instead of lax.erf because exact-erf lowering support inside Mosaic
# varies by jaxlib version; the approximation error is far below test tolerance.
# -----------------------------------------------------------------------------
def _erf_poly(x):
    a1, a2, a3, a4, a5 = (0.254829592, -0.284496736, 1.421413741,
                          -1.453152027, 1.061405429)
    p = 0.3275911
    ax = jnp.abs(x)
    t = 1.0 / (1.0 + p * ax)
    poly = ((((a5 * t + a4) * t + a3) * t + a2) * t + a1) * t
    y = 1.0 - poly * jnp.exp(-ax * ax)
    return jnp.where(x >= 0, y, -y)


def _gelu_exact(x):
    return 0.5 * x * (1.0 + _erf_poly(x * _SQRT1_2))


# -----------------------------------------------------------------------------
# Hardware queries (generation-aware sizing).
# -----------------------------------------------------------------------------
def _vmem_capacity_bytes():
    try:
        return int(pltpu.get_tpu_info().vmem_capacity_bytes)
    except Exception:
        return 64 * 2**20          # conservative (v7x-sized) fallback


def _tensorcores_per_chip():
    try:
        kind = jax.devices()[0].device_kind.lower()
    except Exception:
        return 1
    return 2 if "7" in kind else 1     # v7x has 2 TensorCores per chip


# -----------------------------------------------------------------------------
# Kernels.
# -----------------------------------------------------------------------------
def _fused_tail_kernel(h_ref, b1_ref, g_ref, bt_ref, w2_ref, b2_ref, o_ref, *,
                       inv_c, mm_dtype):
    """Single pass: GELU(h+b1) -> GRN -> (.)@w2 + b2 for b_tile batch elems."""
    b1 = b1_ref[...]            # (1, C4) f32
    gamma = g_ref[...]          # (1, C4) f32
    beta = bt_ref[...]          # (1, C4) f32
    w2 = w2_ref[...]            # (C4, D) mm_dtype
    b2 = b2_ref[...]            # (1, D)  f32
    for b in range(h_ref.shape[0]):
        x = _gelu_exact(h_ref[b].astype(jnp.float32) + b1)          # (HW, C4)
        gx = jnp.sqrt(jnp.sum(x * x, axis=0, keepdims=True))        # (1, C4)
        mean_c = jnp.sum(gx, axis=-1, keepdims=True) * inv_c        # (1, 1)
        scale = gamma * (gx / (mean_c + 1e-6)) + 1.0                # (1, C4)
        y = x * scale + beta                                        # (HW, C4)
        out = jnp.dot(y.astype(mm_dtype), w2,
                      preferred_element_type=jnp.float32)           # (HW, D)
        o_ref[b] = (out + b2).astype(o_ref.dtype)


def _gelu_sumsq_kernel(h_ref, b1_ref, acc_ref):
    """Two-phase pass 1: accumulate per-channel sum of squares of GELU(h+b1)."""
    @pl.when(pl.program_id(1) == 0)
    def _init():
        acc_ref[...] = jnp.zeros_like(acc_ref)

    b1 = b1_ref[...]
    for b in range(h_ref.shape[0]):
        x = _gelu_exact(h_ref[b].astype(jnp.float32) + b1)
        acc_ref[b] = acc_ref[b] + jnp.sum(x * x, axis=0, keepdims=True)


def _apply_pw2_kernel(h_ref, sc_ref, b1_ref, bt_ref, w2_ref, b2_ref, o_ref, *,
                      mm_dtype):
    """Two-phase pass 2: recompute GELU, apply folded GRN scale, pwconv2."""
    b1 = b1_ref[...]
    beta = bt_ref[...]
    w2 = w2_ref[...]
    b2 = b2_ref[...]
    for b in range(h_ref.shape[0]):
        x = _gelu_exact(h_ref[b].astype(jnp.float32) + b1)
        y = x * sc_ref[b] + beta
        out = jnp.dot(y.astype(mm_dtype), w2, preferred_element_type=jnp.float32)
        o_ref[b] = (out + b2).astype(o_ref.dtype)


# -----------------------------------------------------------------------------
# Wrapper: fused GELU -> GRN -> pwconv2 tail.
# -----------------------------------------------------------------------------
def fused_gelu_grn_pwconv2(h, b1, gamma, beta, w2, b2, *, block_bytes_budget=None):
    """h: (N, H, W, C4) = LN(dwconv(x)) @ w1 (no bias).  Returns (N, H, W, D)."""
    N, H, W, C4 = h.shape
    HW = H * W
    D = w2.shape[1]
    in_dt = h.dtype
    mm_dtype = jnp.bfloat16 if in_dt == jnp.bfloat16 else jnp.float32

    h2 = h.reshape(N, HW, C4)                              # free reshape
    b1r = jnp.asarray(b1, jnp.float32).reshape(1, C4)
    gr = jnp.asarray(gamma, jnp.float32).reshape(1, C4)
    btr = jnp.asarray(beta, jnp.float32).reshape(1, C4)
    w2r = jnp.asarray(w2, mm_dtype)
    b2r = jnp.asarray(b2, jnp.float32).reshape(1, D)

    vmem_cap = _vmem_capacity_bytes()
    budget = (block_bytes_budget if block_bytes_budget is not None
              else int(0.70 * vmem_cap))
    vmem_limit = int(min(100 * 2**20, int(0.85 * vmem_cap)))
    n_tc = _tensorcores_per_chip()

    in_item = jnp.dtype(in_dt).itemsize
    mm_item = jnp.dtype(mm_dtype).itemsize

    def est(bt, hw_len):
        in_blk = bt * hw_len * C4 * in_item
        out_blk = bt * hw_len * D * in_item
        work = hw_len * (3 * C4 + 2 * D) * 4          # per-batch f32 temporaries
        params = C4 * (3 * 4 + D * mm_item) + D * 4
        return 2 * (in_blk + out_blk) + work + params + (1 << 20)

    # ---- path 1: single pass (full H*W resident per batch element) ----------
    b_tile = 0
    for cand in range(min(N, 8), 0, -1):
        if N % cand:
            continue
        if n_tc > 1 and N > 1 and cand == N:
            continue      # keep >= 2 grid steps so both v7x TensorCores get work
        if est(cand, HW) <= budget:
            b_tile = cand
            break

    if b_tile:
        kern = functools.partial(_fused_tail_kernel, inv_c=1.0 / C4,
                                 mm_dtype=mm_dtype)
        out2 = pl.pallas_call(
            kern,
            out_shape=jax.ShapeDtypeStruct((N, HW, D), in_dt),
            grid=(N // b_tile,),
            in_specs=[
                pl.BlockSpec((b_tile, HW, C4), lambda n: (n, 0, 0)),
                pl.BlockSpec((1, C4), lambda n: (0, 0)),     # b1     (resident)
                pl.BlockSpec((1, C4), lambda n: (0, 0)),     # gamma  (resident)
                pl.BlockSpec((1, C4), lambda n: (0, 0)),     # beta   (resident)
                pl.BlockSpec((C4, D), lambda n: (0, 0)),     # w2     (resident)
                pl.BlockSpec((1, D), lambda n: (0, 0)),      # b2     (resident)
            ],
            out_specs=pl.BlockSpec((b_tile, HW, D), lambda n: (n, 0, 0)),
            compiler_params=pltpu.CompilerParams(
                dimension_semantics=("parallel",),
                vmem_limit_bytes=vmem_limit),
        )(h2, b1r, gr, btr, w2r, b2r)
        return out2.reshape(N, H, W, D)

    # ---- path 2: two-phase, spatially chunked (large HW / small VMEM) -------
    chunks = [d for d in range(1, HW + 1)
              if HW % d == 0 and (d == HW or d % 8 == 0)]
    fitting = [d for d in chunks if est(1, d) <= budget]
    hw_chunk = max(fitting) if fitting else min(chunks)
    n_s = HW // hw_chunk

    sumsq = pl.pallas_call(
        _gelu_sumsq_kernel,
        out_shape=jax.ShapeDtypeStruct((N, 1, C4), jnp.float32),
        grid=(N, n_s),
        in_specs=[
            pl.BlockSpec((1, hw_chunk, C4), lambda n, s: (n, s, 0)),
            pl.BlockSpec((1, C4), lambda n, s: (0, 0)),
        ],
        out_specs=pl.BlockSpec((1, 1, C4), lambda n, s: (n, 0, 0)),
        compiler_params=pltpu.CompilerParams(
            dimension_semantics=("parallel", "arbitrary"),
            vmem_limit_bytes=vmem_limit),
    )(h2, b1r)

    # Tiny (N, 1, C4) finalize in plain JAX: Gx, Nx and the folded scale.
    gx = jnp.sqrt(sumsq)
    nx = gx / (jnp.sum(gx, axis=-1, keepdims=True) * (1.0 / C4) + 1e-6)
    scale = gr[None] * nx + 1.0                                  # (N, 1, C4) f32

    kern2 = functools.partial(_apply_pw2_kernel, mm_dtype=mm_dtype)
    out2 = pl.pallas_call(
        kern2,
        out_shape=jax.ShapeDtypeStruct((N, HW, D), in_dt),
        grid=(N, n_s),
        in_specs=[
            pl.BlockSpec((1, hw_chunk, C4), lambda n, s: (n, s, 0)),
            pl.BlockSpec((1, 1, C4), lambda n, s: (n, 0, 0)),    # scale
            pl.BlockSpec((1, C4), lambda n, s: (0, 0)),          # b1
            pl.BlockSpec((1, C4), lambda n, s: (0, 0)),          # beta
            pl.BlockSpec((C4, D), lambda n, s: (0, 0)),          # w2
            pl.BlockSpec((1, D), lambda n, s: (0, 0)),           # b2
        ],
        out_specs=pl.BlockSpec((1, hw_chunk, D), lambda n, s: (n, s, 0)),
        compiler_params=pltpu.CompilerParams(
            dimension_semantics=("parallel", "parallel"),
            vmem_limit_bytes=vmem_limit),
    )(h2, scale, b1r, btr, w2r, b2r)
    return out2.reshape(N, H, W, D)


# -----------------------------------------------------------------------------
# Pure-JAX reference for the fused tail (mirrors PyTorch GELU(exact)+GRN+Linear).
# -----------------------------------------------------------------------------
def fused_tail_reference(h, b1, gamma, beta, w2, b2):
    x = jax.nn.gelu(h.astype(jnp.float32) + jnp.asarray(b1, jnp.float32),
                    approximate=False)
    gx = jnp.sqrt(jnp.sum(x * x, axis=(1, 2), keepdims=True))
    nx = gx / (jnp.mean(gx, axis=-1, keepdims=True) + 1e-6)
    g = jnp.asarray(gamma, jnp.float32).reshape(1, 1, 1, -1)
    bt = jnp.asarray(beta, jnp.float32).reshape(1, 1, 1, -1)
    y = g * (x * nx) + bt + x
    out = y @ jnp.asarray(w2, jnp.float32) + jnp.asarray(b2, jnp.float32)
    return out.astype(h.dtype)


# -----------------------------------------------------------------------------
# ConvNeXtV2 Block forward (NHWC throughout; drop_path = identity).
# TODO(synk): 7x7 depthwise conv, LayerNorm and pwconv1 are left to XLA.
# -----------------------------------------------------------------------------
def convnextv2_block_forward_nhwc(x, p, tail_fn):
    dim = x.shape[-1]
    y = jax.lax.conv_general_dilated(
        x, p["w_dw"], window_strides=(1, 1), padding=((3, 3), (3, 3)),
        dimension_numbers=("NHWC", "HWIO", "NHWC"), feature_group_count=dim)
    y = y + p["b_dw"]
    mu = jnp.mean(y, axis=-1, keepdims=True)
    var = jnp.mean(jnp.square(y - mu), axis=-1, keepdims=True)
    y = (y - mu) * jax.lax.rsqrt(var + 1e-6) * p["ln_w"] + p["ln_b"]
    h = y @ p["w1"]                       # pwconv1 (bias b1 fused into the tail)
    out = tail_fn(h, p["b1"], p["g_grn"], p["b_grn"], p["w2"], p["b2"])
    return x + out


def convnextv2_block_forward_nchw(x_nchw, p, tail_fn):
    """Preserves the PyTorch NCHW signature; in a full network keep NHWC."""
    x = jnp.transpose(x_nchw, (0, 2, 3, 1))
    y = convnextv2_block_forward_nhwc(x, p, tail_fn)
    return jnp.transpose(y, (0, 3, 1, 2))


# -----------------------------------------------------------------------------
# Tests.
# -----------------------------------------------------------------------------
if __name__ == "__main__":
    key = jax.random.PRNGKey(0)
    keys = jax.random.split(key, 24)

    # --- 1. fused tail, f32, lane-aligned channels (C4 = 128) ---------------
    N, H, W, dim = 2, 8, 8, 32
    C4 = 4 * dim
    h = jax.random.normal(keys[0], (N, H, W, C4), jnp.float32)
    b1 = 0.1 * jax.random.normal(keys[1], (C4,), jnp.float32)
    g_grn = 0.1 * jax.random.normal(keys[2], (C4,), jnp.float32)
    b_grn = 0.1 * jax.random.normal(keys[3], (C4,), jnp.float32)
    w2 = 0.1 * jax.random.normal(keys[4], (C4, dim), jnp.float32)
    b2 = 0.05 * jax.random.normal(keys[5], (dim,), jnp.float32)

    out = jax.block_until_ready(fused_gelu_grn_pwconv2(h, b1, g_grn, b_grn, w2, b2))
    ref = fused_tail_reference(h, b1, g_grn, b_grn, w2, b2)
    assert out.shape == ref.shape
    assert jnp.allclose(out, ref, atol=1e-4, rtol=1e-4), "tail mismatch (f32, C4=128)"

    # --- 2. non-128-multiple channels, odd spatial (no wrapper pad/slice) ---
    N2, H2, W2, dim2 = 2, 7, 7, 24          # C4 = 96, HW = 49
    C42 = 4 * dim2
    h2 = jax.random.normal(keys[6], (N2, H2, W2, C42), jnp.float32)
    b12 = 0.1 * jax.random.normal(keys[7], (C42,), jnp.float32)
    g2 = 0.1 * jax.random.normal(keys[8], (C42,), jnp.float32)
    bt2 = 0.1 * jax.random.normal(keys[9], (C42,), jnp.float32)
    w22 = 0.1 * jax.random.normal(keys[10], (C42, dim2), jnp.float32)
    b22 = 0.05 * jax.random.normal(keys[11], (dim2,), jnp.float32)
    out2 = jax.block_until_ready(fused_gelu_grn_pwconv2(h2, b12, g2, bt2, w22, b22))
    ref2 = fused_tail_reference(h2, b12, g2, bt2, w22, b22)
    assert jnp.allclose(out2, ref2, atol=1e-4, rtol=1e-4), "tail mismatch (C4=96)"

    # --- 3. bf16 activations (elementwise stays f32, matmul in bf16) --------
    h_bf = h.astype(jnp.bfloat16)
    out_bf = jax.block_until_ready(
        fused_gelu_grn_pwconv2(h_bf, b1, g_grn, b_grn, w2, b2))
    ref_bf = fused_tail_reference(h_bf, b1, g_grn, b_grn, w2, b2)
    assert out_bf.dtype == jnp.bfloat16
    assert jnp.allclose(out_bf.astype(jnp.float32), ref_bf.astype(jnp.float32),
                        atol=5e-2, rtol=5e-2), "tail mismatch (bf16)"

    # --- 4. forced two-phase (spatially chunked) path ------------------------
    out_tp = jax.block_until_ready(
        fused_gelu_grn_pwconv2(h, b1, g_grn, b_grn, w2, b2,
                               block_bytes_budget=64 * 1024))
    assert jnp.allclose(out_tp, ref, atol=1e-4, rtol=1e-4), "two-phase mismatch"

    # --- 5. full ConvNeXtV2 Block forward (NHWC, Pallas tail inside) --------
    Nb, Hb, Wb, dimb = 2, 16, 16, 32
    C4b = 4 * dimb
    xb = jax.random.normal(keys[12], (Nb, Hb, Wb, dimb), jnp.float32)
    params = dict(
        w_dw=0.1 * jax.random.normal(keys[13], (7, 7, 1, dimb), jnp.float32),
        b_dw=0.1 * jax.random.normal(keys[14], (dimb,), jnp.float32),
        ln_w=1.0 + 0.1 * jax.random.normal(keys[15], (dimb,), jnp.float32),
        ln_b=0.1 * jax.random.normal(keys[16], (dimb,), jnp.float32),
        w1=0.1 * jax.random.normal(keys[17], (dimb, C4b), jnp.float32),
        b1=0.1 * jax.random.normal(keys[18], (C4b,), jnp.float32),
        # gamma/beta are zeros at init in PyTorch; use small random values so
        # the normalization path is actually exercised.
        g_grn=0.1 * jax.random.normal(keys[19], (C4b,), jnp.float32),
        b_grn=0.1 * jax.random.normal(keys[20], (C4b,), jnp.float32),
        w2=0.1 * jax.random.normal(keys[21], (C4b, dimb), jnp.float32),
        b2=0.05 * jax.random.normal(keys[22], (dimb,), jnp.float32),
    )
    out_blk = jax.block_until_ready(
        convnextv2_block_forward_nhwc(xb, params, fused_gelu_grn_pwconv2))
    ref_blk = convnextv2_block_forward_nhwc(xb, params, fused_tail_reference)
    assert out_blk.shape == xb.shape
    assert jnp.allclose(out_blk, ref_blk, atol=1e-4, rtol=1e-4), "Block mismatch"

    # --- 6. NCHW boundary wrapper (PyTorch signature parity) ----------------
    xb_nchw = jnp.transpose(xb, (0, 3, 1, 2))
    out_nchw = jax.block_until_ready(
        convnextv2_block_forward_nchw(xb_nchw, params, fused_gelu_grn_pwconv2))
    assert jnp.allclose(out_nchw, jnp.transpose(out_blk, (0, 3, 1, 2)),
                        atol=1e-5, rtol=1e-5), "NCHW wrapper mismatch"

    print("KERNEL_OK")
</pallas_src>

<mosaic_0001>
module attributes {stable_mosaic.version = 11 : i64} {
  func.func @_fused_tail_kernel(%arg0: i32, %arg1: memref<2x64x128xf32, #tpu.memory_space<vmem>>, %arg2: memref<1x128xf32, #tpu.memory_space<vmem>>, %arg3: memref<1x128xf32, #tpu.memory_space<vmem>>, %arg4: memref<1x128xf32, #tpu.memory_space<vmem>>, %arg5: memref<128x32xf32, #tpu.memory_space<vmem>>, %arg6: memref<1x32xf32, #tpu.memory_space<vmem>>, %arg7: memref<2x64x32xf32, #tpu.memory_space<vmem>>) attributes {dimension_semantics = [#tpu.dimension_semantics<parallel>], iteration_bounds = array<i64: 1>, scalar_prefetch = 0 : i64, scratch_operands = 0 : i64, tpu.core_type = #tpu.core_type<tc>, window_params = [{transform_indices = @transform_0, window_bounds = array<i64: 2, 64, 128>}, {pipeline_mode = #tpu.pipeline_mode<synchronous>, transform_indices = @transform_1, window_bounds = array<i64: 1, 128>}, {pipeline_mode = #tpu.pipeline_mode<synchronous>, transform_indices = @transform_2, window_bounds = array<i64: 1, 128>}, {pipeline_mode = #tpu.pipeline_mode<synchronous>, transform_indices = @transform_3, window_bounds = array<i64: 1, 128>}, {pipeline_mode = #tpu.pipeline_mode<synchronous>, transform_indices = @transform_4, window_bounds = array<i64: 128, 32>}, {pipeline_mode = #tpu.pipeline_mode<synchronous>, transform_indices = @transform_5, window_bounds = array<i64: 1, 32>}, {transform_indices = @transform_6, window_bounds = array<i64: 2, 64, 32>}]} {
    %c0 = arith.constant 0 : index
    %c0_0 = arith.constant 0 : index
    %0 = vector.load %arg2[%c0, %c0_0] : memref<1x128xf32, #tpu.memory_space<vmem>>, vector<1x128xf32>
    %c0_1 = arith.constant 0 : index
    %c0_2 = arith.constant 0 : index
    %1 = vector.load %arg3[%c0_1, %c0_2] : memref<1x128xf32, #tpu.memory_space<vmem>>, vector<1x128xf32>
    %c0_3 = arith.constant 0 : index
    %c0_4 = arith.constant 0 : index
    %2 = vector.load %arg4[%c0_3, %c0_4] : memref<1x128xf32, #tpu.memory_space<vmem>>, vector<1x128xf32>
    %c0_5 = arith.constant 0 : index
    %c0_6 = arith.constant 0 : index
    %3 = vector.load %arg5[%c0_5, %c0_6] : memref<128x32xf32, #tpu.memory_space<vmem>>, vector<128x32xf32>
    %c0_7 = arith.constant 0 : index
    %c0_8 = arith.constant 0 : index
    %4 = vector.load %arg6[%c0_7, %c0_8] : memref<1x32xf32, #tpu.memory_space<vmem>>, vector<1x32xf32>
    %c0_9 = arith.constant 0 : index
    %c0_10 = arith.constant 0 : index
    %c0_11 = arith.constant 0 : index
    %5 = vector.load %arg1[%c0_9, %c0_10, %c0_11] : memref<2x64x128xf32, #tpu.memory_space<vmem>>, vector<1x64x128xf32>
    %6 = vector.shape_cast %5 : vector<1x64x128xf32> to vector<64x128xf32>
    %7 = vector.broadcast %0 : vector<1x128xf32> to vector<64x128xf32>
    %8 = arith.addf %6, %7 : vector<64x128xf32>
    %cst = arith.constant 5.000000e-01 : f32
    %9 = vector.broadcast %cst : f32 to vector<64x128xf32>
    %10 = arith.mulf %9, %8 : vector<64x128xf32>
    %cst_12 = arith.constant 0.707106769 : f32
    %11 = vector.broadcast %cst_12 : f32 to vector<64x128xf32>
    %12 = arith.mulf %8, %11 : vector<64x128xf32>
    %13 = math.absf %12 : vector<64x128xf32>
    %cst_13 = arith.constant 0.327591091 : f32
    %14 = vector.broadcast %cst_13 : f32 to vector<64x128xf32>
    %15 = arith.mulf %14, %13 : vector<64x128xf32>
    %cst_14 = arith.constant 1.000000e+00 : f32
    %16 = vector.broadcast %cst_14 : f32 to vector<64x128xf32>
    %17 = arith.addf %16, %15 : vector<64x128xf32>
    %cst_15 = arith.constant 1.000000e+00 : f32
    %18 = vector.broadcast %cst_15 : f32 to vector<64x128xf32>
    %19 = arith.divf %18, %17 : vector<64x128xf32>
    %cst_16 = arith.constant 1.06140542 : f32
    %20 = vector.broadcast %cst_16 : f32 to vector<64x128xf32>
    %21 = arith.mulf %20, %19 : vector<64x128xf32>
    %cst_17 = arith.constant -1.45315206 : f32
    %22 = vector.broadcast %cst_17 : f32 to vector<64x128xf32>
    %23 = arith.addf %21, %22 : vector<64x128xf32>
    %24 = arith.mulf %23, %19 : vector<64x128xf32>
    %cst_18 = arith.constant 1.42141378 : f32
    %25 = vector.broadcast %cst_18 : f32 to vector<64x128xf32>
    %26 = arith.addf %24, %25 : vector<64x128xf32>
    %27 = arith.mulf %26, %19 : vector<64x128xf32>
    %cst_19 = arith.constant -0.284496725 : f32
    %28 = vector.broadcast %cst_19 : f32 to vector<64x128xf32>
    %29 = arith.addf %27, %28 : vector<64x128xf32>
    %30 = arith.mulf %29, %19 : vector<64x128xf32>
    %cst_20 = arith.constant 0.254829586 : f32
    %31 = vector.broadcast %cst_20 : f32 to vector<64x128xf32>
    %32 = arith.addf %30, %31 : vector<64x128xf32>
    %33 = arith.mulf %32, %19 : vector<64x128xf32>
    %cst_21 = arith.constant 0.000000e+00 : f32
    %34 = vector.broadcast %cst_21 : f32 to vector<64x128xf32>
    %35 = arith.subf %34, %13 : vector<64x128xf32>
    %36 = arith.mulf %35, %13 : vector<64x128xf32>
    %37 = math.exp %36 : vector<64x128xf32>
    %38 = arith.mulf %33, %37 : vector<64x128xf32>
    %cst_22 = arith.constant 1.000000e+00 : f32
    %39 = vector.broadcast %cst_22 : f32 to vector<64x128xf32>
    %40 = arith.subf %39, %38 : vector<64x128xf32>
    %cst_23 = arith.constant 0.000000e+00 : f32
    %41 = vector.broadcast %cst_23 : f32 to vector<64x128xf32>
    %42 = arith.cmpf oge, %12, %41 : vector<64x128xf32>
    %cst_24 = arith.constant 0.000000e+00 : f32
    %43 = vector.broadcast %cst_24 : f32 to vector<64x128xf32>
    %44 = arith.subf %43, %40 : vector<64x128xf32>
    %45 = arith.select %42, %40, %44 : vector<64x128xi1>, vector<64x128xf32>
    %cst_25 = arith.constant 1.000000e+00 : f32
    %46 = vector.broadcast %cst_25 : f32 to vector<64x128xf32>
    %47 = arith.addf %46, %45 : vector<64x128xf32>
    %48 = arith.mulf %10, %47 : vector<64x128xf32>
    %49 = arith.mulf %48, %48 : vector<64x128xf32>
    %cst_26 = arith.constant dense<0.000000e+00> : vector<128xf32>
    %50 = vector.multi_reduction <add>, %49, %cst_26 [0] : vector<64x128xf32> to vector<128xf32>
    %51 = vector.shape_cast %50 : vector<128xf32> to vector<1x128xf32>
    %52 = math.sqrt %51 : vector<1x128xf32>
    %cst_27 = arith.constant dense<0.000000e+00> : vector<1xf32>
    %53 = vector.multi_reduction <add>, %52, %cst_27 [1] : vector<1x128xf32> to vector<1xf32>
    %54 = vector.shape_cast %53 : vector<1xf32> to vector<1x1xf32>
    %cst_28 = arith.constant 7.812500e-03 : f32
    %55 = vector.broadcast %cst_28 : f32 to vector<1x1xf32>
    %56 = arith.mulf %54, %55 : vector<1x1xf32>
    %cst_29 = arith.constant 9.99999997E-7 : f32
    %57 = vector.broadcast %cst_29 : f32 to vector<1x1xf32>
    %58 = arith.addf %56, %57 : vector<1x1xf32>
    %59 = vector.broadcast %58 : vector<1x1xf32> to vector<1x128xf32>
    %60 = arith.divf %52, %59 : vector<1x128xf32>
    %61 = arith.mulf %1, %60 : vector<1x128xf32>
    %cst_30 = arith.constant 1.000000e+00 : f32
    %62 = vector.broadcast %cst_30 : f32 to vector<1x128xf32>
    %63 = arith.addf %61, %62 : vector<1x128xf32>
    %64 = vector.broadcast %63 : vector<1x128xf32> to vector<64x128xf32>
    %65 = arith.mulf %48, %64 : vector<64x128xf32>
    %66 = vector.broadcast %2 : vector<1x128xf32> to vector<64x128xf32>
    %67 = arith.addf %65, %66 : vector<64x128xf32>
    %cst_31 = arith.constant dense<0.000000e+00> : vector<64x32xf32>
    %68 = tpu.matmul %67, %3, %cst_31 {dimension_numbers = #tpu.dot_dimension_numbers<[1], [0], [0], [1], [0, 0, 1, 1], [], []>} : vector<64x128xf32>, vector<128x32xf32>, vector<64x32xf32> -> vector<64x32xf32>
    %69 = vector.broadcast %4 : vector<1x32xf32> to vector<64x32xf32>
    %70 = arith.addf %68, %69 : vector<64x32xf32>
    %c0_32 = arith.constant 0 : index
    %c0_33 = arith.constant 0 : index
    %c0_34 = arith.constant 0 : index
    %71 = vector.load %arg7[%c0_32, %c0_33, %c0_34] : memref<2x64x32xf32, #tpu.memory_space<vmem>>, vector<1x64x32xf32>
    %72 = vector.shape_cast %71 : vector<1x64x32xf32> to vector<64x32xf32>
    %73 = vector.shape_cast %70 : vector<64x32xf32> to vector<1x64x32xf32>
    tpu.vector_store %arg7[%c0_32, %c0_33, %c0_34], %73 {strides = array<i32>} : memref<2x64x32xf32, #tpu.memory_space<vmem>>, vector<1x64x32xf32>,
    %c1 = arith.constant 1 : index
    %c0_35 = arith.constant 0 : index
    %c0_36 = arith.constant 0 : index
    %74 = vector.load %arg1[%c1, %c0_35, %c0_36] : memref<2x64x128xf32, #tpu.memory_space<vmem>>, vector<1x64x128xf32>
    %75 = vector.shape_cast %74 : vector<1x64x128xf32> to vector<64x128xf32>
    %76 = vector.broadcast %0 : vector<1x128xf32> to vector<64x128xf32>
    %77 = arith.addf %75, %76 : vector<64x128xf32>
    %cst_37 = arith.constant 5.000000e-01 : f32
    %78 = vector.broadcast %cst_37 : f32 to vector<64x128xf32>
    %79 = arith.mulf %78, %77 : vector<64x128xf32>
    %cst_38 = arith.constant 0.707106769 : f32
    %80 = vector.broadcast %cst_38 : f32 to vector<64x128xf32>
    %81 = arith.mulf %77, %80 : vector<64x128xf32>
    %82 = math.absf %81 : vector<64x128xf32>
    %cst_39 = arith.constant 0.327591091 : f32
    %83 = vector.broadcast %cst_39 : f32 to vector<64x128xf32>
    %84 = arith.mulf %83, %82 : vector<64x128xf32>
    %cst_40 = arith.constant 1.000000e+00 : f32
    %85 = vector.broadcast %cst_40 : f32 to vector<64x128xf32>
    %86 = arith.addf %85, %84 : vector<64x128xf32>
    %cst_41 = arith.constant 1.000000e+00 : f32
    %87 = vector.broadcast %cst_41 : f32 to vector<64x128xf32>
    %88 = arith.divf %87, %86 : vector<64x128xf32>
    %cst_42 = arith.constant 1.06140542 : f32
    %89 = vector.broadcast %cst_42 : f32 to vector<64x128xf32>
    %90 = arith.mulf %89, %88 : vector<64x128xf32>
    %cst_43 = arith.constant -1.45315206 : f32
    %91 = vector.broadcast %cst_43 : f32 to vector<64x128xf32>
    %92 = arith.addf %90, %91 : vector<64x128xf32>
    %93 = arith.mulf %92, %88 : vector<64x128xf32>
    %cst_44 = arith.constant 1.42141378 : f32
    %94 = vector.broadcast %cst_44 : f32 to vector<64x128xf32>
    %95 = arith.addf %93, %94 : vector<64x128xf32>
    %96 = arith.mulf %95, %88 : vector<64x128xf32>
    %cst_45 = arith.constant -0.284496725 : f32
    %97 = vector.broadcast %cst_45 : f32 to vector<64x128xf32>
    %98 = arith.addf %96, %97 : vector<64x128xf32>
    %99 = arith.mulf %98, %88 : vector<64x128xf32>
    %cst_46 = arith.constant 0.254829586 : f32
    %100 = vector.broadcast %cst_46 : f32 to vector<64x128xf32>
    %101 = arith.addf %99, %100 : vector<64x128xf32>
    %102 = arith.mulf %101, %88 : vector<64x128xf32>
    %cst_47 = arith.constant 0.000000e+00 : f32
    %103 = vector.broadcast %cst_47 : f32 to vector<64x128xf32>
    %104 = arith.subf %103, %82 : vector<64x128xf32>
    %105 = arith.mulf %104, %82 : vector<64x128xf32>
    %106 = math.exp %105 : vector<64x128xf32>
    %107 = arith.mulf %102, %106 : vector<64x128xf32>
    %cst_48 = arith.constant 1.000000e+00 : f32
    %108 = vector.broadcast %cst_48 : f32 to vector<64x128xf32>
    %109 = arith.subf %108, %107 : vector<64x128xf32>
    %cst_49 = arith.constant 0.000000e+00 : f32
    %110 = vector.broadcast %cst_49 : f32 to vector<64x128xf32>
    %111 = arith.cmpf oge, %81, %110 : vector<64x128xf32>
    %cst_50 = arith.constant 0.000000e+00 : f32
    %112 = vector.broadcast %cst_50 : f32 to vector<64x128xf32>
    %113 = arith.subf %112, %109 : vector<64x128xf32>
    %114 = arith.select %111, %109, %113 : vector<64x128xi1>, vector<64x128xf32>
    %cst_51 = arith.constant 1.000000e+00 : f32
    %115 = vector.broadcast %cst_51 : f32 to vector<64x128xf32>
    %116 = arith.addf %115, %114 : vector<64x128xf32>
    %117 = arith.mulf %79, %116 : vector<64x128xf32>
    %118 = arith.mulf %117, %117 : vector<64x128xf32>
    %cst_52 = arith.constant dense<0.000000e+00> : vector<128xf32>
    %119 = vector.multi_reduction <add>, %118, %cst_52 [0] : vector<64x128xf32> to vector<128xf32>
    %120 = vector.shape_cast %119 : vector<128xf32> to vector<1x128xf32>
    %121 = math.sqrt %120 : vector<1x128xf32>
    %cst_53 = arith.constant dense<0.000000e+00> : vector<1xf32>
    %122 = vector.multi_reduction <add>, %121, %cst_53 [1] : vector<1x128xf32> to vector<1xf32>
    %123 = vector.shape_cast %122 : vector<1xf32> to vector<1x1xf32>
    %cst_54 = arith.constant 7.812500e-03 : f32
    %124 = vector.broadcast %cst_54 : f32 to vector<1x1xf32>
    %125 = arith.mulf %123, %124 : vector<1x1xf32>
    %cst_55 = arith.constant 9.99999997E-7 : f32
    %126 = vector.broadcast %cst_55 : f32 to vector<1x1xf32>
    %127 = arith.addf %125, %126 : vector<1x1xf32>
    %128 = vector.broadcast %127 : vector<1x1xf32> to vector<1x128xf32>
    %129 = arith.divf %121, %128 : vector<1x128xf32>
    %130 = arith.mulf %1, %129 : vector<1x128xf32>
    %cst_56 = arith.constant 1.000000e+00 : f32
    %131 = vector.broadcast %cst_56 : f32 to vector<1x128xf32>
    %132 = arith.addf %130, %131 : vector<1x128xf32>
    %133 = vector.broadcast %132 : vector<1x128xf32> to vector<64x128xf32>
    %134 = arith.mulf %117, %133 : vector<64x128xf32>
    %135 = vector.broadcast %2 : vector<1x128xf32> to vector<64x128xf32>
    %136 = arith.addf %134, %135 : vector<64x128xf32>
    %cst_57 = arith.constant dense<0.000000e+00> : vector<64x32xf32>
    %137 = tpu.matmul %136, %3, %cst_57 {dimension_numbers = #tpu.dot_dimension_numbers<[1], [0], [0], [1], [0, 0, 1, 1], [], []>} : vector<64x128xf32>, vector<128x32xf32>, vector<64x32xf32> -> vector<64x32xf32>
    %138 = vector.broadcast %4 : vector<1x32xf32> to vector<64x32xf32>
    %139 = arith.addf %137, %138 : vector<64x32xf32>
    %c1_58 = arith.constant 1 : index
    %c0_59 = arith.constant 0 : index
    %c0_60 = arith.constant 0 : index
    %140 = vector.load %arg7[%c1_58, %c0_59, %c0_60] : memref<2x64x32xf32, #tpu.memory_space<vmem>>, vector<1x64x32xf32>
    %141 = vector.shape_cast %140 : vector<1x64x32xf32> to vector<64x32xf32>
    %142 = vector.shape_cast %139 : vector<64x32xf32> to vector<1x64x32xf32>
    tpu.vector_store %arg7[%c1_58, %c0_59, %c0_60], %142 {strides = array<i32>} : memref<2x64x32xf32, #tpu.memory_space<vmem>>, vector<1x64x32xf32>,
    return
  }
  func.func @transform_0(%arg0: i32) -> (i32, i32, i32) {
    %c0_i32 = arith.constant 0 : i32
    %c0_i32_0 = arith.constant 0 : i32
    %c0_i32_1 = arith.constant 0 : i32
    return %arg0, %c0_i32, %c0_i32_0 : i32, i32, i32
  }
  func.func @transform_1(%arg0: i32) -> (i32, i32) {
    %c0_i32 = arith.constant 0 : i32
    %c0_i32_0 = arith.constant 0 : i32
    %c0_i32_1 = arith.constant 0 : i32
    return %c0_i32, %c0_i32_0 : i32, i32
  }
  func.func @transform_2(%arg0: i32) -> (i32, i32) {
    %c0_i32 = arith.constant 0 : i32
    %c0_i32_0 = arith.constant 0 : i32
    %c0_i32_1 = arith.constant 0 : i32
    return %c0_i32, %c0_i32_0 : i32, i32
  }
  func.func @transform_3(%arg0: i32) -> (i32, i32) {
    %c0_i32 = arith.constant 0 : i32
    %c0_i32_0 = arith.constant 0 : i32
    %c0_i32_1 = arith.constant 0 : i32
    return %c0_i32, %c0_i32_0 : i32, i32
  }
  func.func @transform_4(%arg0: i32) -> (i32, i32) {
    %c0_i32 = arith.constant 0 : i32
    %c0_i32_0 = arith.constant 0 : i32
    %c0_i32_1 = arith.constant 0 : i32
    return %c0_i32, %c0_i32_0 : i32, i32
  }
  func.func @transform_5(%arg0: i32) -> (i32, i32) {
    %c0_i32 = arith.constant 0 : i32
    %c0_i32_0 = arith.constant 0 : i32
    %c0_i32_1 = arith.constant 0 : i32
    return %c0_i32, %c0_i32_0 : i32, i32
  }
  func.func @transform_6(%arg0: i32) -> (i32, i32, i32) {
    %c0_i32 = arith.constant 0 : i32
    %c0_i32_0 = arith.constant 0 : i32
    %c0_i32_1 = arith.constant 0 : i32
    return %arg0, %c0_i32, %c0_i32_0 : i32, i32, i32
  }
}

</mosaic_0001>

<llo_original>
// kernel: tpu_custom_call.1
$region0: #{tpu_custom_call.1}
  #allocation0 [shape = 'u32[]', space=smem, size = 0x4, offset = 0x4, fixed_abs, tag = 'smem constant byte address 0x4 - core index']
  #allocation1 [shape = 'u32[144,128]{1,0:T(1,128)}', space=vmem, size = 0x12000, scoped, tag = 'internal scratch']
  %s0 = inlined_call_operand.vmem [shape: f32[2,64,128], index: 0, kind: input, shape index: {}]
  %s1 = inlined_call_operand.vmem [shape: f32[1,128], index: 1, kind: input, shape index: {}]
  %s2 = inlined_call_operand.vmem [shape: f32[1,128], index: 2, kind: input, shape index: {}]
  %s3 = inlined_call_operand.vmem [shape: f32[1,128], index: 3, kind: input, shape index: {}]
  %s4 = inlined_call_operand.vmem [shape: f32[128,32], index: 4, kind: input, shape index: {}]
  %s5 = inlined_call_operand.vmem [shape: f32[1,32], index: 5, kind: input, shape index: {}]
  %s6 = inlined_call_operand.vmem [shape: f32[2,64,32], index: 6, kind: output, shape index: {}]
  %s7 = sld [smem:[#allocation0]]
  $region34: #{tpu_custom_call.1} parent=0
    _
  %s9 = ssub.s32 1, %s7
  %s10 = scalar_select 0, %s9, %s7
  // Predicated region
  $region2: #{tpu_custom_call.1} parent=0 // pred_check
    _
  $region3: #{tpu_custom_call.1} parent=0 // pred_check_branch
    %12 = sbr.rel (0) target = $region5
  $region4: #{tpu_custom_call.1} parent=0 // pred_region
    _
  $region5: #{tpu_custom_call.1} parent=0 // pred_fallthru
    _
  // Predicated region
  $region6: #{tpu_custom_call.1} parent=0 // pred_check
    _
  $region7: #{tpu_custom_call.1} parent=0 // pred_check_branch
    %14 = sbr.rel (0) target = $region9
  $region8: #{tpu_custom_call.1} parent=0 // pred_region
    _
  $region9: #{tpu_custom_call.1} parent=0 // pred_fallthru
    _
  // Predicated region
  $region10: #{tpu_custom_call.1} parent=0 // pred_check
    _
  $region11: #{tpu_custom_call.1} parent=0 // pred_check_branch
    %16 = sbr.rel (0) target = $region13
  $region12: #{tpu_custom_call.1} parent=0 // pred_region
    _
  $region13: #{tpu_custom_call.1} parent=0 // pred_fallthru
    _
  // Predicated region
  $region14: #{tpu_custom_call.1} parent=0 // pred_check
    _
  $region15: #{tpu_custom_call.1} parent=0 // pred_check_branch
    %18 = sbr.rel (0) target = $region17
  $region16: #{tpu_custom_call.1} parent=0 // pred_region
    _
  $region17: #{tpu_custom_call.1} parent=0 // pred_fallthru
    _
  // Predicated region
  $region18: #{tpu_custom_call.1} parent=0 // pred_check
    _
  $region19: #{tpu_custom_call.1} parent=0 // pred_check_branch
    %20 = sbr.rel (0) target = $region21
  $region20: #{tpu_custom_call.1} parent=0 // pred_region
    _
  $region21: #{tpu_custom_call.1} parent=0 // pred_fallthru
    _
  // Predicated region
  $region22: #{tpu_custom_call.1} parent=0 // pred_check
    _
  $region23: #{tpu_custom_call.1} parent=0 // pred_check_branch
    %22 = sbr.rel (0) target = $region25
  $region24: #{tpu_custom_call.1} parent=0 // pred_region
    _
  $region25: #{tpu_custom_call.1} parent=0 // pred_fallthru
    _
  %v23 = vld [vmem:[%s1] sm:$0x1]
  %v24 = vld [vmem:[%s2] sm:$0x1]
  %v25 = vld [vmem:[%s3] sm:$0x1]
  %v26 = vld [vmem:[%s4] sm:$0xff]
  %v27 = vld [vmem:[%s4 + $0x8] sm:$0xff]
  %v28 = vld [vmem:[%s4 + $0x10] sm:$0xff]
  %v29 = vld [vmem:[%s4 + $0x18] sm:$0xff]
  %v30 = vld [vmem:[%s4 + $0x20] sm:$0xff]
  %v31 = vld [vmem:[%s4 + $0x28] sm:$0xff]
  %v32 = vld [vmem:[%s4 + $0x30] sm:$0xff]
  %v33 = vld [vmem:[%s4 + $0x38] sm:$0xff]
  %v34 = vld [vmem:[%s4 + $0x40] sm:$0xff]
  %v35 = vld [vmem:[%s4 + $0x48] sm:$0xff]
  %v36 = vld [vmem:[%s4 + $0x50] sm:$0xff]
  %v37 = vld [vmem:[%s4 + $0x58] sm:$0xff]
  %v38 = vld [vmem:[%s4 + $0x60] sm:$0xff]
  %v39 = vld [vmem:[%s4 + $0x68] sm:$0xff]
  %v40 = vld [vmem:[%s4 + $0x70] sm:$0xff]
  %v41 = vld [vmem:[%s4 + $0x78] sm:$0xff]
  %v42 = vld [vmem:[%s5] sm:$0x1]
  %v43 = vld [vmem:[%s0] sm:$0xff]
  %v44 = vld [vmem:[%s0 + $0x8] sm:$0xff]
  %v45 = vld [vmem:[%s0 + $0x10] sm:$0xff]
  %v46 = vld [vmem:[%s0 + $0x18] sm:$0xff]
  %v47 = vld [vmem:[%s0 + $0x20] sm:$0xff]
  %v48 = vld [vmem:[%s0 + $0x28] sm:$0xff]
  %v49 = vld [vmem:[%s0 + $0x30] sm:$0xff]
  %v50 = vld [vmem:[%s0 + $0x38] sm:$0xff]
  %v52 = vlaneseq
  %v53 = vshrl.u32 %v52, 7
  %v54 = vsub.s32 0, %v53
  %v55 = vrot.slane %v23, %v54
  %v57 = vadd.f32 %v43, %v55
  %v58 = vadd.f32 %v44, %v55
  %v59 = vadd.f32 %v45, %v55
  %v60 = vadd.f32 %v46, %v55
  %v61 = vadd.f32 %v47, %v55
  %v62 = vadd.f32 %v48, %v55
  %v63 = vadd.f32 %v49, %v55
  %v64 = vadd.f32 %v50, %v55
  %v65 = vmul.f32 %v57, 0.5
  %v66 = vmul.f32 %v58, 0.5
  %v67 = vmul.f32 %v59, 0.5
  %v68 = vmul.f32 %v60, 0.5
  %v69 = vmul.f32 %v61, 0.5
  %v70 = vmul.f32 %v62, 0.5
  %v71 = vmul.f32 %v63, 0.5
  %v72 = vmul.f32 %v64, 0.5
  %v73 = vmul.f32 %v57, 0.70710677
  %v74 = vmul.f32 %v58, 0.70710677
  %v75 = vmul.f32 %v59, 0.70710677
  %v76 = vmul.f32 %v60, 0.70710677
  %v77 = vmul.f32 %v61, 0.70710677
  %v78 = vmul.f32 %v62, 0.70710677
  %v79 = vmul.f32 %v63, 0.70710677
  %v80 = vmul.f32 %v64, 0.70710677
  %v81 = vand.u32 2147483647, %v73
  %v82 = vand.u32 2147483647, %v74
  %v83 = vand.u32 2147483647, %v75
  %v84 = vand.u32 2147483647, %v76
  %v85 = vand.u32 2147483647, %v77
  %v86 = vand.u32 2147483647, %v78
  %v87 = vand.u32 2147483647, %v79
  %v88 = vand.u32 2147483647, %v80
  %v89 = vmul.f32 %v81, 0.3275911
  %v90 = vmul.f32 %v82, 0.3275911
  %v91 = vmul.f32 %v83, 0.3275911
  %v92 = vmul.f32 %v84, 0.3275911
  %v93 = vmul.f32 %v85, 0.3275911
  %v94 = vmul.f32 %v86, 0.3275911
  %v95 = vmul.f32 %v87, 0.3275911
  %v96 = vmul.f32 %v88, 0.3275911
  %v97 = vadd.f32 %v89, 1.0
  %v98 = vadd.f32 %v90, 1.0
  %v99 = vadd.f32 %v91, 1.0
  %v100 = vadd.f32 %v92, 1.0
  %v101 = vadd.f32 %v93, 1.0
  %v102 = vadd.f32 %v94, 1.0
  %v103 = vadd.f32 %v95, 1.0
  %v104 = vadd.f32 %v96, 1.0
  %v105 = vrcp.pop %v97
  %v106 = vmul.f32 1.0, %v105
  %v107 = vrcp.pop %v98
  %v108 = vmul.f32 1.0, %v107
  %v109 = vrcp.pop %v99
  %v110 = vmul.f32 1.0, %v109
  %v111 = vrcp.pop %v100
  %v112 = vmul.f32 1.0, %v111
  %v113 = vrcp.pop %v101
  %v114 = vmul.f32 1.0, %v113
  %v115 = vrcp.pop %v102
  %v116 = vmul.f32 1.0, %v115
  %v117 = vrcp.pop %v103
  %v118 = vmul.f32 1.0, %v117
  %v119 = vrcp.pop %v104
  %v120 = vmul.f32 1.0, %v119
  %v121 = vmul.f32 %v106, 1.0614054
  %v122 = vmul.f32 %v108, 1.0614054
  %v123 = vmul.f32 %v110, 1.0614054
  %v124 = vmul.f32 %v112, 1.0614054
  %v125 = vmul.f32 %v114, 1.0614054
  %v126 = vmul.f32 %v116, 1.0614054
  %v127 = vmul.f32 %v118, 1.0614054
  %v128 = vmul.f32 %v120, 1.0614054
  %v129 = vadd.f32 %v121, -1.4531521
  %v130 = vadd.f32 %v122, -1.4531521
  %v131 = vadd.f32 %v123, -1.4531521
  %v132 = vadd.f32 %v124, -1.4531521
  %v133 = vadd.f32 %v125, -1.4531521
  %v134 = vadd.f32 %v126, -1.4531521
  %v135 = vadd.f32 %v127, -1.4531521
  %v136 = vadd.f32 %v128, -1.4531521
  %v137 = vmul.f32 %v129, %v106
  %v138 = vmul.f32 %v130, %v108
  %v139 = vmul.f32 %v131, %v110
  %v140 = vmul.f32 %v132, %v112
  %v141 = vmul.f32 %v133, %v114
  %v142 = vmul.f32 %v134, %v116
  %v143 = vmul.f32 %v135, %v118
  %v144 = vmul.f32 %v136, %v120
  %v145 = vadd.f32 %v137, 1.4214138
  %v146 = vadd.f32 %v138, 1.4214138
  %v147 = vadd.f32 %v139, 1.4214138
  %v148 = vadd.f32 %v140, 1.4214138
  %v149 = vadd.f32 %v141, 1.4214138
  %v150 = vadd.f32 %v142, 1.4214138
  %v151 = vadd.f32 %v143, 1.4214138
  %v152 = vadd.f32 %v144, 1.4214138
  %v153 = vmul.f32 %v145, %v106
  %v154 = vmul.f32 %v146, %v108
  %v155 = vmul.f32 %v147, %v110
  %v156 = vmul.f32 %v148, %v112
  %v157 = vmul.f32 %v149, %v114
  %v158 = vmul.f32 %v150, %v116
  %v159 = vmul.f32 %v151, %v118
  %v160 = vmul.f32 %v152, %v120
  %v161 = vadd.f32 %v153, -0.28449672
  %v162 = vadd.f32 %v154, -0.28449672
  %v163 = vadd.f32 %v155, -0.28449672
  %v164 = vadd.f32 %v156, -0.28449672
  %v165 = vadd.f32 %v157, -0.28449672
  %v166 = vadd.f32 %v158, -0.28449672
  %v167 = vadd.f32 %v159, -0.28449672
  %v168 = vadd.f32 %v160, -0.28449672
  %v169 = vmul.f32 %v161, %v106
  %v170 = vmul.f32 %v162, %v108
  %v171 = vmul.f32 %v163, %v110
  %v172 = vmul.f32 %v164, %v112
  %v173 = vmul.f32 %v165, %v114
  %v174 = vmul.f32 %v166, %v116
  %v175 = vmul.f32 %v167, %v118
  %v176 = vmul.f32 %v168, %v120
  %v177 = vadd.f32 %v169, 0.2548296
  %v178 = vadd.f32 %v170, 0.2548296
  %v179 = vadd.f32 %v171, 0.2548296
  %v180 = vadd.f32 %v172, 0.2548296
  %v181 = vadd.f32 %v173, 0.2548296
  %v182 = vadd.f32 %v174, 0.2548296
  %v183 = vadd.f32 %v175, 0.2548296
  %v184 = vadd.f32 %v176, 0.2548296
  %v185 = vmul.f32 %v177, %v106
  %v186 = vmul.f32 %v178, %v108
  %v187 = vmul.f32 %v179, %v110
  %v188 = vmul.f32 %v180, %v112
  %v189 = vmul.f32 %v181, %v114
  %v190 = vmul.f32 %v182, %v116
  %v191 = vmul.f32 %v183, %v118
  %v192 = vmul.f32 %v184, %v120
  %v193 = vsub.f32 0.0, %v81
  %v194 = vsub.f32 0.0, %v82
  %v195 = vsub.f32 0.0, %v83
  %v196 = vsub.f32 0.0, %v84
  %v197 = vsub.f32 0.0, %v85
  %v198 = vsub.f32 0.0, %v86
  %v199 = vsub.f32 0.0, %v87
  %v200 = vsub.f32 0.0, %v88
  %v201 = vmul.f32 %v193, %v81
  %v202 = vmul.f32 %v194, %v82
  %v203 = vmul.f32 %v195, %v83
  %v204 = vmul.f32 %v196, %v84
  %v205 = vmul.f32 %v197, %v85
  %v206 = vmul.f32 %v198, %v86
  %v207 = vmul.f32 %v199, %v87
  %v208 = vmul.f32 %v200, %v88
  %v209 = vmul.f32 %v201, 1.442695
  %v210 = vpow.pop %v209
  %v211 = vmul.f32 %v202, 1.442695
  %v212 = vpow.pop %v211
  %v213 = vmul.f32 %v203, 1.442695
  %v214 = vpow.pop %v213
  %v215 = vmul.f32 %v204, 1.442695
  %v216 = vpow.pop %v215
  %v217 = vmul.f32 %v205, 1.442695
  %v218 = vpow.pop %v217
  %v219 = vmul.f32 %v206, 1.442695
  %v220 = vpow.pop %v219
  %v221 = vmul.f32 %v207, 1.442695
  %v222 = vpow.pop %v221
  %v223 = vmul.f32 %v208, 1.442695
  %v224 = vpow.pop %v223
  %v225 = vmul.f32 %v185, %v210
  %v226 = vmul.f32 %v186, %v212
  %v227 = vmul.f32 %v187, %v214
  %v228 = vmul.f32 %v188, %v216
  %v229 = vmul.f32 %v189, %v218
  %v230 = vmul.f32 %v190, %v220
  %v231 = vmul.f32 %v191, %v222
  %v232 = vmul.f32 %v192, %v224
  %v233 = vsub.f32 1.0, %v225
  %v234 = vsub.f32 1.0, %v226
  %v235 = vsub.f32 1.0, %v227
  %v236 = vsub.f32 1.0, %v228
  %v237 = vsub.f32 1.0, %v229
  %v238 = vsub.f32 1.0, %v230
  %v239 = vsub.f32 1.0, %v231
  %v240 = vsub.f32 1.0, %v232
  %vm241 = vcmp.ge.f32.partialorder %v73, 0.0
  %vm242 = vcmp.ge.f32.partialorder %v74, 0.0
  %vm243 = vcmp.ge.f32.partialorder %v75, 0.0
  %vm244 = vcmp.ge.f32.partialorder %v76, 0.0
  %vm245 = vcmp.ge.f32.partialorder %v77, 0.0
  %vm246 = vcmp.ge.f32.partialorder %v78, 0.0
  %vm247 = vcmp.ge.f32.partialorder %v79, 0.0
  %vm248 = vcmp.ge.f32.partialorder %v80, 0.0
  %v249 = vsub.f32 0.0, %v233
  %v250 = vsub.f32 0.0, %v234
  %v251 = vsub.f32 0.0, %v235
  %v252 = vsub.f32 0.0, %v236
  %v253 = vsub.f32 0.0, %v237
  %v254 = vsub.f32 0.0, %v238
  %v255 = vsub.f32 0.0, %v239
  %v256 = vsub.f32 0.0, %v240
  %v257 = vsel %vm241, %v233, %v249
  %v258 = vsel %vm242, %v234, %v250
  %v259 = vsel %vm243, %v235, %v251
  %v260 = vsel %vm244, %v236, %v252
  %v261 = vsel %vm245, %v237, %v253
  %v262 = vsel %vm246, %v238, %v254
  %v263 = vsel %vm247, %v239, %v255
  %v264 = vsel %vm248, %v240, %v256
  %v265 = vadd.f32 %v257, 1.0
  %v266 = vadd.f32 %v258, 1.0
  %v267 = vadd.f32 %v259, 1.0
  %v268 = vadd.f32 %v260, 1.0
  %v269 = vadd.f32 %v261, 1.0
  %v270 = vadd.f32 %v262, 1.0
  %v271 = vadd.f32 %v263, 1.0
  %v272 = vadd.f32 %v264, 1.0
  %v273 = vmul.f32 %v65, %v265
  %v274 = vmul.f32 %v66, %v266
  %v275 = vmul.f32 %v67, %v267
  %v276 = vmul.f32 %v68, %v268
  %v277 = vmul.f32 %v69, %v269
  %v278 = vmul.f32 %v70, %v270
  %v279 = vmul.f32 %v71, %v271
  %v280 = vmul.f32 %v72, %v272
  %v281 = vmul.f32 %v273, %v273
  %v282 = vmul.f32 %v274, %v274
  %v283 = vmul.f32 %v275, %v275
  %v284 = vmul.f32 %v276, %v276
  %v285 = vmul.f32 %v277, %v277
  %v286 = vmul.f32 %v278, %v278
  %v287 = vmul.f32 %v279, %v279
  %v288 = vmul.f32 %v280, %v280
  %v289 = vadd.f32 %v281, %v282
  %v290 = vadd.f32 %v289, %v283
  %v291 = vadd.f32 %v290, %v284
  %v292 = vadd.f32 %v291, %v285
  %v293 = vadd.f32 %v292, %v286
  %v294 = vadd.f32 %v293, %v287
  %v295 = vadd.f32 %v294, %v288
  %v296 = vrot.slane %v295, 4
  %v297 = vadd.f32 %v295, %v296
  %v298 = vrot.slane %v297, 2
  %v299 = vadd.f32 %v297, %v298
  %v300 = vrot.slane %v299, 1
  %v301 = vadd.f32 %v299, %v300
  %v302 = vrsqrt.pop %v301
  %v303 = vmul.f32 %v301, %v302
  %vm304 = vcmp.eq.f32.partialorder %v301, inf
  %v305 = vsel %vm304, %v301, %v303
  %vm306 = vcmp.eq.f32.partialorder %v301, 0.0
  %v307 = vand.u32 %v301, 2147483648
  %v308 = vsel %vm306, %v307, %v305
  %309 = vadd.xlane.f32.xlu0 %v308
  %v310 = vpop.xlane.xlu0 %309
  %v311 = vmul.f32 %v310, 0.0078125
  %v312 = vadd.f32 %v311, 1e-06
  %v313 = vrcp.pop %v312
  %v314 = vmul.f32 %v308, %v313
  %v315 = vmul.f32 %v24, %v314
  %v316 = vadd.f32 %v315, 1.0
  %v318 = vlaneseq
  %v319 = vshrl.u32 %v318, 7
  %v320 = vsub.s32 0, %v319
  %v321 = vrot.slane %v316, %v320
  %v323 = vmul.f32 %v273, %v321
  %v324 = vmul.f32 %v274, %v321
  %v325 = vmul.f32 %v275, %v321
  %v326 = vmul.f32 %v276, %v321
  %v327 = vmul.f32 %v277, %v321
  %v328 = vmul.f32 %v278, %v321
  %v329 = vmul.f32 %v279, %v321
  %v330 = vmul.f32 %v280, %v321
  %v332 = vlaneseq
  %v333 = vshrl.u32 %v332, 7
  %v334 = vsub.s32 0, %v333
  %v335 = vrot.slane %v25, %v334
  %v337 = vadd.f32 %v323, %v335
  %v338 = vadd.f32 %v324, %v335
  %v339 = vadd.f32 %v325, %v335
  %v340 = vadd.f32 %v326, %v335
  %v341 = vadd.f32 %v327, %v335
  %v342 = vadd.f32 %v328, %v335
  %v343 = vadd.f32 %v329, %v335
  %v344 = vadd.f32 %v330, %v335
  %v346 = vlaneseq
  %v347 = vshrl.u32 %v346, 7
  %v348 = vsub.s32 0, %v347
  %v349 = vrot.slane %v42, %v348
  %351 = vmatprep.subr.mxu0 0.0
  %352 = vmatpush1.msra.mxu0 %v26
  %353 = vmatprep.subr.mxu0 0.0
  %354 = vmatpush1.msra.mxu0 %v27
  %355 = vmatprep.subr.mxu0 0.0
  %356 = vmatpush1.msra.mxu0 %v28
  %357 = vmatprep.subr.mxu0 0.0
  %358 = vmatpush1.msra.mxu0 %v29
  %359 = vmatprep.subr.mxu0 0.0
  %360 = vmatpush1.msra.mxu0 %v30
  %361 = vmatprep.subr.mxu0 0.0
  %362 = vmatpush1.msra.mxu0 %v31
  %363 = vmatprep.subr.mxu0 0.0
  %364 = vmatpush1.msra.mxu0 %v32
  %365 = vmatprep.subr.mxu0 0.0
  %366 = vmatpush1.msra.mxu0 %v33
  %367 = vmatprep.subr.mxu0 0.0
  %368 = vmatpush1.msra.mxu0 %v34
  %369 = vmatprep.subr.mxu0 0.0
  %370 = vmatpush1.msra.mxu0 %v35
  %371 = vmatprep.subr.mxu0 0.0
  %372 = vmatpush1.msra.mxu0 %v36
  %373 = vmatprep.subr.mxu0 0.0
  %374 = vmatpush1.msra.mxu0 %v37
  %375 = vmatprep.subr.mxu0 0.0
  %376 = vmatpush1.msra.mxu0 %v38
  %377 = vmatprep.subr.mxu0 0.0
  %378 = vmatpush1.msra.mxu0 %v39
  %379 = vmatprep.subr.mxu0 0.0
  %380 = vmatpush1.msra.mxu0 %v40
  %381 = vmatprep.subr.mxu0 0.0
  %382 = vmatpush1.msra.mxu0 %v41
  %383 = vmatprep.subr.mxu0 0.0
  %384 = vmatpush1.msra.mxu0 0.0
  %385 = vmatprep.subr.mxu0 0.0
  %386 = vmatpush1.msra.mxu0 0.0
  %387 = vmatprep.subr.mxu0 0.0
  %388 = vmatpush1.msra.mxu0 0.0
  %389 = vmatprep.subr.mxu0 0.0
  %390 = vmatpush1.msra.mxu0 0.0
  %391 = vmatprep.subr.mxu0 0.0
  %392 = vmatpush1.msra.mxu0 0.0
  %393 = vmatprep.subr.mxu0 0.0
  %394 = vmatpush1.msra.mxu0 0.0
  %395 = vmatprep.subr.mxu0 0.0
  %396 = vmatpush1.msra.mxu0 0.0
  %397 = vmatprep.subr.mxu0 0.0
  %398 = vmatpush1.msra.mxu0 0.0
  %399 = vmatprep.subr.mxu0 0.0
  %400 = vmatpush1.msra.mxu0 0.0
  %401 = vmatprep.subr.mxu0 0.0
  %402 = vmatpush1.msra.mxu0 0.0
  %403 = vmatprep.subr.mxu0 0.0
  %404 = vmatpush1.msra.mxu0 0.0
  %405 = vmatprep.subr.mxu0 0.0
  %406 = vmatpush1.msra.mxu0 0.0
  %407 = vmatprep.subr.mxu0 0.0
  %408 = vmatpush1.msra.mxu0 0.0
  %409 = vmatprep.subr.mxu0 0.0
  %410 = vmatpush1.msra.mxu0 0.0
  %411 = vmatprep.subr.mxu0 0.0
  %412 = vmatpush1.msra.mxu0 0.0
  %413 = vmatprep.subr.mxu0 0.0
  %414 = vmatpush1.msra.mxu0 0.0
  %415 = vmatprep.mubr.f32.mxu0 0.0
  %416 = vmatmul.mubr.f32.gmra.mrb[0].mxu0 %v337
  %v417 = vpop.f32.mrb[0].mxu0
  %v418 = vadd.f32 %v349, %v417
  %v419 = vpop.f32.mrb[0].mxu0
  %420 = vmatprep.mubr.f32.mxu0 0.0
  %421 = vmatmul.mubr.f32.gmra.mrb[0].mxu0 %v338
  %v422 = vpop.f32.mrb[0].mxu0
  %v423 = vadd.f32 %v349, %v422
  %v424 = vpop.f32.mrb[0].mxu0
  %425 = vmatprep.mubr.f32.mxu0 0.0
  %426 = vmatmul.mubr.f32.gmra.mrb[0].mxu0 %v339
  %v427 = vpop.f32.mrb[0].mxu0
  %v428 = vadd.f32 %v349, %v427
  %v429 = vpop.f32.mrb[0].mxu0
  %430 = vmatprep.mubr.f32.mxu0 0.0
  %431 = vmatmul.mubr.f32.gmra.mrb[0].mxu0 %v340
  %v432 = vpop.f32.mrb[0].mxu0
  %v433 = vadd.f32 %v349, %v432
  %v434 = vpop.f32.mrb[0].mxu0
  %435 = vmatprep.mubr.f32.mxu0 0.0
  %436 = vmatmul.mubr.f32.gmra.mrb[0].mxu0 %v341
  %v437 = vpop.f32.mrb[0].mxu0
  %v438 = vadd.f32 %v349, %v437
  %v439 = vpop.f32.mrb[0].mxu0
  %440 = vmatprep.mubr.f32.mxu0 0.0
  %441 = vmatmul.mubr.f32.gmra.mrb[0].mxu0 %v342
  %v442 = vpop.f32.mrb[0].mxu0
  %v443 = vadd.f32 %v349, %v442
  %v444 = vpop.f32.mrb[0].mxu0
  %445 = vmatprep.mubr.f32.mxu0 0.0
  %446 = vmatmul.mubr.f32.gmra.mrb[0].mxu0 %v343
  %v447 = vpop.f32.mrb[0].mxu0
  %v448 = vadd.f32 %v349, %v447
  %v449 = vpop.f32.mrb[0].mxu0
  %450 = vmatprep.mubr.f32.mxu0 0.0
  %451 = vmatmul.mubr.f32.gmra.mrb[0].mxu0 %v344
  %v452 = vpop.f32.mrb[0].mxu0
  %v453 = vadd.f32 %v349, %v452
  %v454 = vpop.f32.mrb[0].mxu0
  %455 = vdwg.mxu0
  %vm456 = vcmask 261120
  %457 = vst.msk [vmem:[%s6] sm:$0xff] %vm456, %v418
  %458 = vst.msk [vmem:[%s6 + $0x8] sm:$0xff] %vm456, %v423
  %459 = vst.msk [vmem:[%s6 + $0x10] sm:$0xff] %vm456, %v428
  %460 = vst.msk [vmem:[%s6 + $0x18] sm:$0xff] %vm456, %v433
  %461 = vst.msk [vmem:[%s6 + $0x20] sm:$0xff] %vm456, %v438
  %462 = vst.msk [vmem:[%s6 + $0x28] sm:$0xff] %vm456, %v443
  %463 = vst.msk [vmem:[%s6 + $0x30] sm:$0xff] %vm456, %v448
  %464 = vst.msk [vmem:[%s6 + $0x38] sm:$0xff] %vm456, %v453
  %s465 = scalar_lea.vmem %s0, 64
  %v466 = vld [vmem:[%s465] sm:$0xff]
  %v467 = vld [vmem:[%s465 + $0x8] sm:$0xff]
  %v468 = vld [vmem:[%s465 + $0x10] sm:$0xff]
  %v469 = vld [vmem:[%s465 + $0x18] sm:$0xff]
  %v470 = vld [vmem:[%s465 + $0x20] sm:$0xff]
  %v471 = vld [vmem:[%s465 + $0x28] sm:$0xff]
  %v472 = vld [vmem:[%s465 + $0x30] sm:$0xff]
  %v473 = vld [vmem:[%s465 + $0x38] sm:$0xff]
  %v474 = vadd.f32 %v466, %v55
  %v475 = vadd.f32 %v467, %v55
  %v476 = vadd.f32 %v468, %v55
  %v477 = vadd.f32 %v469, %v55
  %v478 = vadd.f32 %v470, %v55
  %v479 = vadd.f32 %v471, %v55
  %v480 = vadd.f32 %v472, %v55
  %v481 = vadd.f32 %v473, %v55
  %v482 = vmul.f32 %v474, 0.5
  %v483 = vmul.f32 %v475, 0.5
  %v484 = vmul.f32 %v476, 0.5
  %v485 = vmul.f32 %v477, 0.5
  %v486 = vmul.f32 %v478, 0.5
  %v487 = vmul.f32 %v479, 0.5
  %v488 = vmul.f32 %v480, 0.5
  %v489 = vmul.f32 %v481, 0.5
  %v490 = vmul.f32 %v474, 0.70710677
  %v491 = vmul.f32 %v475, 0.70710677
  %v492 = vmul.f32 %v476, 0.70710677
  %v493 = vmul.f32 %v477, 0.70710677
  %v494 = vmul.f32 %v478, 0.70710677
  %v495 = vmul.f32 %v479, 0.70710677
  %v496 = vmul.f32 %v480, 0.70710677
  %v497 = vmul.f32 %v481, 0.70710677
  %v498 = vand.u32 2147483647, %v490
  %v499 = vand.u32 2147483647, %v491
  %v500 = vand.u32 2147483647, %v492
  %v501 = vand.u32 2147483647, %v493
  %v502 = vand.u32 2147483647, %v494
  %v503 = vand.u32 2147483647, %v495
  %v504 = vand.u32 2147483647, %v496
  %v505 = vand.u32 2147483647, %v497
  %v506 = vmul.f32 %v498, 0.3275911
  %v507 = vmul.f32 %v499, 0.3275911
  %v508 = vmul.f32 %v500, 0.3275911
  %v509 = vmul.f32 %v501, 0.3275911
  %v510 = vmul.f32 %v502, 0.3275911
  %v511 = vmul.f32 %v503, 0.3275911
  %v512 = vmul.f32 %v504, 0.3275911
  %v513 = vmul.f32 %v505, 0.3275911
  %v514 = vadd.f32 %v506, 1.0
  %v515 = vadd.f32 %v507, 1.0
  %v516 = vadd.f32 %v508, 1.0
  %v517 = vadd.f32 %v509, 1.0
  %v518 = vadd.f32 %v510, 1.0
  %v519 = vadd.f32 %v511, 1.0
  %v520 = vadd.f32 %v512, 1.0
  %v521 = vadd.f32 %v513, 1.0
  %v522 = vrcp.pop %v514
  %v523 = vmul.f32 1.0, %v522
  %v524 = vrcp.pop %v515
  %v525 = vmul.f32 1.0, %v524
  %v526 = vrcp.pop %v516
  %v527 = vmul.f32 1.0, %v526
  %v528 = vrcp.pop %v517
  %v529 = vmul.f32 1.0, %v528
  %v530 = vrcp.pop %v518
  %v531 = vmul.f32 1.0, %v530
  %v532 = vrcp.pop %v519
  %v533 = vmul.f32 1.0, %v532
  %v534 = vrcp.pop %v520
  %v535 = vmul.f32 1.0, %v534
  %v536 = vrcp.pop %v521
  %v537 = vmul.f32 1.0, %v536
  %v538 = vmul.f32 %v523, 1.0614054
  %v539 = vmul.f32 %v525, 1.0614054
  %v540 = vmul.f32 %v527, 1.0614054
  %v541 = vmul.f32 %v529, 1.0614054
  %v542 = vmul.f32 %v531, 1.0614054
  %v543 = vmul.f32 %v533, 1.0614054
  %v544 = vmul.f32 %v535, 1.0614054
  %v545 = vmul.f32 %v537, 1.0614054
  %v546 = vadd.f32 %v538, -1.4531521
  %v547 = vadd.f32 %v539, -1.4531521
  %v548 = vadd.f32 %v540, -1.4531521
  %v549 = vadd.f32 %v541, -1.4531521
  %v550 = vadd.f32 %v542, -1.4531521
  %v551 = vadd.f32 %v543, -1.4531521
  %v552 = vadd.f32 %v544, -1.4531521
  %v553 = vadd.f32 %v545, -1.4531521
  %v554 = vmul.f32 %v546, %v523
  %v555 = vmul.f32 %v547, %v525
  %v556 = vmul.f32 %v548, %v527
  %v557 = vmul.f32 %v549, %v529
  %v558 = vmul.f32 %v550, %v531
  %v559 = vmul.f32 %v551, %v533
  %v560 = vmul.f32 %v552, %v535
  %v561 = vmul.f32 %v553, %v537
  %v562 = vadd.f32 %v554, 1.4214138
  %v563 = vadd.f32 %v555, 1.4214138
  %v564 = vadd.f32 %v556, 1.4214138
  %v565 = vadd.f32 %v557, 1.4214138
  %v566 = vadd.f32 %v558, 1.4214138
  %v567 = vadd.f32 %v559, 1.4214138
  %v568 = vadd.f32 %v560, 1.4214138
  %v569 = vadd.f32 %v561, 1.4214138
  %v570 = vmul.f32 %v562, %v523
  %v571 = vmul.f32 %v563, %v525
  %v572 = vmul.f32 %v564, %v527
  %v573 = vmul.f32 %v565, %v529
  %v574 = vmul.f32 %v566, %v531
  %v575 = vmul.f32 %v567, %v533
  %v576 = vmul.f32 %v568, %v535
  %v577 = vmul.f32 %v569, %v537
  %v578 = vadd.f32 %v570, -0.28449672
  %v579 = vadd.f32 %v571, -0.28449672
  %v580 = vadd.f32 %v572, -0.28449672
  %v581 = vadd.f32 %v573, -0.28449672
  %v582 = vadd.f32 %v574, -0.28449672
  %v583 = vadd.f32 %v575, -0.28449672
  %v584 = vadd.f32 %v576, -0.28449672
  %v585 = vadd.f32 %v577, -0.28449672
  %v586 = vmul.f32 %v578, %v523
  %v587 = vmul.f32 %v579, %v525
  %v588 = vmul.f32 %v580, %v527
  %v589 = vmul.f32 %v581, %v529
  %v590 = vmul.f32 %v582, %v531
  %v591 = vmul.f32 %v583, %v533
  %v592 = vmul.f32 %v584, %v535
  %v593 = vmul.f32 %v585, %v537
  %v594 = vadd.f32 %v586, 0.2548296
  %v595 = vadd.f32 %v587, 0.2548296
  %v596 = vadd.f32 %v588, 0.2548296
  %v597 = vadd.f32 %v589, 0.2548296
  %v598 = vadd.f32 %v590, 0.2548296
  %v599 = vadd.f32 %v591, 0.2548296
  %v600 = vadd.f32 %v592, 0.2548296
  %v601 = vadd.f32 %v593, 0.2548296
  %v602 = vmul.f32 %v594, %v523
  %v603 = vmul.f32 %v595, %v525
  %v604 = vmul.f32 %v596, %v527
  %v605 = vmul.f32 %v597, %v529
  %v606 = vmul.f32 %v598, %v531
  %v607 = vmul.f32 %v599, %v533
  %v608 = vmul.f32 %v600, %v535
  %v609 = vmul.f32 %v601, %v537
  %v610 = vsub.f32 0.0, %v498
  %v611 = vsub.f32 0.0, %v499
  %v612 = vsub.f32 0.0, %v500
  %v613 = vsub.f32 0.0, %v501
  %v614 = vsub.f32 0.0, %v502
  %v615 = vsub.f32 0.0, %v503
  %v616 = vsub.f32 0.0, %v504
  %v617 = vsub.f32 0.0, %v505
  %v618 = vmul.f32 %v610, %v498
  %v619 = vmul.f32 %v611, %v499
  %v620 = vmul.f32 %v612, %v500
  %v621 = vmul.f32 %v613, %v501
  %v622 = vmul.f32 %v614, %v502
  %v623 = vmul.f32 %v615, %v503
  %v624 = vmul.f32 %v616, %v504
  %v625 = vmul.f32 %v617, %v505
  %v626 = vmul.f32 %v618, 1.442695
  %v627 = vpow.pop %v626
  %v628 = vmul.f32 %v619, 1.442695
  %v629 = vpow.pop %v628
  %v630 = vmul.f32 %v620, 1.442695
  %v631 = vpow.pop %v630
  %v632 = vmul.f32 %v621, 1.442695
  %v633 = vpow.pop %v632
  %v634 = vmul.f32 %v622, 1.442695
  %v635 = vpow.pop %v634
  %v636 = vmul.f32 %v623, 1.442695
  %v637 = vpow.pop %v636
  %v638 = vmul.f32 %v624, 1.442695
  %v639 = vpow.pop %v638
  %v640 = vmul.f32 %v625, 1.442695
  %v641 = vpow.pop %v640
  %v642 = vmul.f32 %v602, %v627
  %v643 = vmul.f32 %v603, %v629
  %v644 = vmul.f32 %v604, %v631
  %v645 = vmul.f32 %v605, %v633
  %v646 = vmul.f32 %v606, %v635
  %v647 = vmul.f32 %v607, %v637
  %v648 = vmul.f32 %v608, %v639
  %v649 = vmul.f32 %v609, %v641
  %v650 = vsub.f32 1.0, %v642
  %v651 = vsub.f32 1.0, %v643
  %v652 = vsub.f32 1.0, %v644
  %v653 = vsub.f32 1.0, %v645
  %v654 = vsub.f32 1.0, %v646
  %v655 = vsub.f32 1.0, %v647
  %v656 = vsub.f32 1.0, %v648
  %v657 = vsub.f32 1.0, %v649
  %vm658 = vcmp.ge.f32.partialorder %v490, 0.0
  %vm659 = vcmp.ge.f32.partialorder %v491, 0.0
  %vm660 = vcmp.ge.f32.partialorder %v492, 0.0
  %vm661 = vcmp.ge.f32.partialorder %v493, 0.0
  %vm662 = vcmp.ge.f32.partialorder %v494, 0.0
  %vm663 = vcmp.ge.f32.partialorder %v495, 0.0
  %vm664 = vcmp.ge.f32.partialorder %v496, 0.0
  %vm665 = vcmp.ge.f32.partialorder %v497, 0.0
  %v666 = vsub.f32 0.0, %v650
  %v667 = vsub.f32 0.0, %v651
  %v668 = vsub.f32 0.0, %v652
  %v669 = vsub.f32 0.0, %v653
  %v670 = vsub.f32 0.0, %v654
  %v671 = vsub.f32 0.0, %v655
  %v672 = vsub.f32 0.0, %v656
  %v673 = vsub.f32 0.0, %v657
  %v674 = vsel %vm658, %v650, %v666
  %v675 = vsel %vm659, %v651, %v667
  %v676 = vsel %vm660, %v652, %v668
  %v677 = vsel %vm661, %v653, %v669
  %v678 = vsel %vm662, %v654, %v670
  %v679 = vsel %vm663, %v655, %v671
  %v680 = vsel %vm664, %v656, %v672
  %v681 = vsel %vm665, %v657, %v673
  %v682 = vadd.f32 %v674, 1.0
  %v683 = vadd.f32 %v675, 1.0
  %v684 = vadd.f32 %v676, 1.0
  %v685 = vadd.f32 %v677, 1.0
  %v686 = vadd.f32 %v678, 1.0
  %v687 = vadd.f32 %v679, 1.0
  %v688 = vadd.f32 %v680, 1.0
  %v689 = vadd.f32 %v681, 1.0
  %v690 = vmul.f32 %v482, %v682
  %v691 = vmul.f32 %v483, %v683
  %v692 = vmul.f32 %v484, %v684
  %v693 = vmul.f32 %v485, %v685
  %v694 = vmul.f32 %v486, %v686
  %v695 = vmul.f32 %v487, %v687
  %v696 = vmul.f32 %v488, %v688
  %v697 = vmul.f32 %v489, %v689
  %v698 = vmul.f32 %v690, %v690
  %v699 = vmul.f32 %v691, %v691
  %v700 = vmul.f32 %v692, %v692
  %v701 = vmul.f32 %v693, %v693
  %v702 = vmul.f32 %v694, %v694
  %v703 = vmul.f32 %v695, %v695
  %v704 = vmul.f32 %v696, %v696
  %v705 = vmul.f32 %v697, %v697
  %v706 = vadd.f32 %v698, %v699
  %v707 = vadd.f32 %v706, %v700
  %v708 = vadd.f32 %v707, %v701
  %v709 = vadd.f32 %v708, %v702
  %v710 = vadd.f32 %v709, %v703
  %v711 = vadd.f32 %v710, %v704
  %v712 = vadd.f32 %v711, %v705
  %v713 = vrot.slane %v712, 4
  %v714 = vadd.f32 %v712, %v713
  %v715 = vrot.slane %v714, 2
  %v716 = vadd.f32 %v714, %v715
  %v717 = vrot.slane %v716, 1
  %v718 = vadd.f32 %v716, %v717
  %v719 = vrsqrt.pop %v718
  %v720 = vmul.f32 %v718, %v719
  %vm721 = vcmp.eq.f32.partialorder %v718, inf
  %v722 = vsel %vm721, %v718, %v720
  %vm723 = vcmp.eq.f32.partialorder %v718, 0.0
  %v724 = vand.u32 %v718, 2147483648
  %v725 = vsel %vm723, %v724, %v722
  %726 = vadd.xlane.f32.xlu0 %v725
  %v727 = vpop.xlane.xlu0 %726
  %v728 = vmul.f32 %v727, 0.0078125
  %v729 = vadd.f32 %v728, 1e-06
  %v730 = vrcp.pop %v729
  %v731 = vmul.f32 %v725, %v730
  %v732 = vmul.f32 %v24, %v731
  %v733 = vadd.f32 %v732, 1.0
  %v735 = vlaneseq
  %v736 = vshrl.u32 %v735, 7
  %v737 = vsub.s32 0, %v736
  %v738 = vrot.slane %v733, %v737
  %v740 = vmul.f32 %v690, %v738
  %v741 = vmul.f32 %v691, %v738
  %v742 = vmul.f32 %v692, %v738
  %v743 = vmul.f32 %v693, %v738
  %v744 = vmul.f32 %v694, %v738
  %v745 = vmul.f32 %v695, %v738
  %v746 = vmul.f32 %v696, %v738
  %v747 = vmul.f32 %v697, %v738
  %v748 = vadd.f32 %v740, %v335
  %v749 = vadd.f32 %v741, %v335
  %v750 = vadd.f32 %v742, %v335
  %v751 = vadd.f32 %v743, %v335
  %v752 = vadd.f32 %v744, %v335
  %v753 = vadd.f32 %v745, %v335
  %v754 = vadd.f32 %v746, %v335
  %v755 = vadd.f32 %v747, %v335
  %756 = vmatprep.subr.mxu0 0.0
  %757 = vmatpush1.msra.mxu0 %v26
  %758 = vmatprep.subr.mxu0 0.0
  %759 = vmatpush1.msra.mxu0 %v27
  %760 = vmatprep.subr.mxu0 0.0
  %761 = vmatpush1.msra.mxu0 %v28
  %762 = vmatprep.subr.mxu0 0.0
  %763 = vmatpush1.msra.mxu0 %v29
  %764 = vmatprep.subr.mxu0 0.0
  %765 = vmatpush1.msra.mxu0 %v30
  %766 = vmatprep.subr.mxu0 0.0
  %767 = vmatpush1.msra.mxu0 %v31
  %768 = vmatprep.subr.mxu0 0.0
  %769 = vmatpush1.msra.mxu0 %v32
  %770 = vmatprep.subr.mxu0 0.0
  %771 = vmatpush1.msra.mxu0 %v33
  %772 = vmatprep.subr.mxu0 0.0
  %773 = vmatpush1.msra.mxu0 %v34
  %774 = vmatprep.subr.mxu0 0.0
  %775 = vmatpush1.msra.mxu0 %v35
  %776 = vmatprep.subr.mxu0 0.0
  %777 = vmatpush1.msra.mxu0 %v36
  %778 = vmatprep.subr.mxu0 0.0
  %779 = vmatpush1.msra.mxu0 %v37
  %780 = vmatprep.subr.mxu0 0.0
  %781 = vmatpush1.msra.mxu0 %v38
  %782 = vmatprep.subr.mxu0 0.0
  %783 = vmatpush1.msra.mxu0 %v39
  %784 = vmatprep.subr.mxu0 0.0
  %785 = vmatpush1.msra.mxu0 %v40
  %786 = vmatprep.subr.mxu0 0.0
  %787 = vmatpush1.msra.mxu0 %v41
  %788 = vmatprep.subr.mxu0 0.0
  %789 = vmatpush1.msra.mxu0 0.0
  %790 = vmatprep.subr.mxu0 0.0
  %791 = vmatpush1.msra.mxu0 0.0
  %792 = vmatprep.subr.mxu0 0.0
  %793 = vmatpush1.msra.mxu0 0.0
  %794 = vmatprep.subr.mxu0 0.0
  %795 = vmatpush1.msra.mxu0 0.0
  %796 = vmatprep.subr.mxu0 0.0
  %797 = vmatpush1.msra.mxu0 0.0
  %798 = vmatprep.subr.mxu0 0.0
  %799 = vmatpush1.msra.mxu0 0.0
  %800 = vmatprep.subr.mxu0 0.0
  %801 = vmatpush1.msra.mxu0 0.0
  %802 = vmatprep.subr.mxu0 0.0
  %803 = vmatpush1.msra.mxu0 0.0
  %804 = vmatprep.subr.mxu0 0.0
  %805 = vmatpush1.msra.mxu0 0.0
  %806 = vmatprep.subr.mxu0 0.0
  %807 = vmatpush1.msra.mxu0 0.0
  %808 = vmatprep.subr.mxu0 0.0
  %809 = vmatpush1.msra.mxu0 0.0
  %810 = vmatprep.subr.mxu0 0.0
  %811 = vmatpush1.msra.mxu0 0.0
  %812 = vmatprep.subr.mxu0 0.0
  %813 = vmatpush1.msra.mxu0 0.0
  %814 = vmatprep.subr.mxu0 0.0
  %815 = vmatpush1.msra.mxu0 0.0
  %816 = vmatprep.subr.mxu0 0.0
  %817 = vmatpush1.msra.mxu0 0.0
  %818 = vmatprep.subr.mxu0 0.0
  %819 = vmatpush1.msra.mxu0 0.0
  %820 = vmatprep.mubr.f32.mxu0 0.0
  %821 = vmatmul.mubr.f32.gmra.mrb[0].mxu0 %v748
  %v822 = vpop.f32.mrb[0].mxu0
  %v823 = vadd.f32 %v349, %v822
  %v824 = vpop.f32.mrb[0].mxu0
  %825 = vmatprep.mubr.f32.mxu0 0.0
  %826 = vmatmul.mubr.f32.gmra.mrb[0].mxu0 %v749
  %v827 = vpop.f32.mrb[0].mxu0
  %v828 = vadd.f32 %v349, %v827
  %v829 = vpop.f32.mrb[0].mxu0
  %830 = vmatprep.mubr.f32.mxu0 0.0
  %831 = vmatmul.mubr.f32.gmra.mrb[0].mxu0 %v750
  %v832 = vpop.f32.mrb[0].mxu0
  %v833 = vadd.f32 %v349, %v832
  %v834 = vpop.f32.mrb[0].mxu0
  %835 = vmatprep.mubr.f32.mxu0 0.0
  %836 = vmatmul.mubr.f32.gmra.mrb[0].mxu0 %v751
  %v837 = vpop.f32.mrb[0].mxu0
  %v838 = vadd.f32 %v349, %v837
  %v839 = vpop.f32.mrb[0].mxu0
  %840 = vmatprep.mubr.f32.mxu0 0.0
  %841 = vmatmul.mubr.f32.gmra.mrb[0].mxu0 %v752
  %v842 = vpop.f32.mrb[0].mxu0
  %v843 = vadd.f32 %v349, %v842
  %v844 = vpop.f32.mrb[0].mxu0
  %845 = vmatprep.mubr.f32.mxu0 0.0
  %846 = vmatmul.mubr.f32.gmra.mrb[0].mxu0 %v753
  %v847 = vpop.f32.mrb[0].mxu0
  %v848 = vadd.f32 %v349, %v847
  %v849 = vpop.f32.mrb[0].mxu0
  %850 = vmatprep.mubr.f32.mxu0 0.0
  %851 = vmatmul.mubr.f32.gmra.mrb[0].mxu0 %v754
  %v852 = vpop.f32.mrb[0].mxu0
  %v853 = vadd.f32 %v349, %v852
  %v854 = vpop.f32.mrb[0].mxu0
  %855 = vmatprep.mubr.f32.mxu0 0.0
  %856 = vmatmul.mubr.f32.gmra.mrb[0].mxu0 %v755
  %v857 = vpop.f32.mrb[0].mxu0
  %v858 = vadd.f32 %v349, %v857
  %v859 = vpop.f32.mrb[0].mxu0
  %860 = vdwg.mxu0
  %s861 = scalar_lea.vmem %s6, 64
  %862 = vst.msk [vmem:[%s861] sm:$0xff] %vm456, %v823
  %863 = vst.msk [vmem:[%s861 + $0x8] sm:$0xff] %vm456, %v828
  %864 = vst.msk [vmem:[%s861 + $0x10] sm:$0xff] %vm456, %v833
  %865 = vst.msk [vmem:[%s861 + $0x18] sm:$0xff] %vm456, %v838
  %866 = vst.msk [vmem:[%s861 + $0x20] sm:$0xff] %vm456, %v843
  %867 = vst.msk [vmem:[%s861 + $0x28] sm:$0xff] %vm456, %v848
  %868 = vst.msk [vmem:[%s861 + $0x30] sm:$0xff] %vm456, %v853
  %869 = vst.msk [vmem:[%s861 + $0x38] sm:$0xff] %vm456, %v858
  // Predicated region
  $region26: #{tpu_custom_call.1} parent=0 // pred_check
    _
  $region27: #{tpu_custom_call.1} parent=0 // pred_check_branch
    %871 = sbr.rel (0) target = $region29
  $region28: #{tpu_custom_call.1} parent=0 // pred_region
    _
  $region29: #{tpu_custom_call.1} parent=0 // pred_fallthru
    _
  // Predicated region
  $region30: #{tpu_custom_call.1} parent=0 // pred_check
    _
  $region31: #{tpu_custom_call.1} parent=0 // pred_check_branch
    %873 = sbr.rel (0) target = $region33
  $region32: #{tpu_custom_call.1} parent=0 // pred_region
    _
  $region33: #{tpu_custom_call.1} parent=0 // pred_fallthru
    _

</llo_original>
